<compile_context>
chip_gen: v7x
topology: tpu7x:2x2x1
jax: 0.10.0
libtpu: 0.0.40
codegen_flags: <defaults>
</compile_context>

<pallas_src>
import functools

import jax
import jax.numpy as jnp
from jax.experimental import pallas as pl
from jax.experimental.pallas import tpu as pltpu


# ---------------------------------------------------------------------------
# Fused kernel: multi-sample denoise + CFG combine + optional masked blend.
#   refs (has_mask=True):
#     x_ref(Bt,C,HW) cin_ref(Bt,1,1) uncond_ref(Bt,Tc,Dc) cond_ref(Bt,Tc,Dc)
#     w_ref(C,C)     wc_ref(C,Dc)    b_ref(C,1)
#     mask_ref(Bt,Mc,HW) x0_ref(Bt,C,HW)   o_ref(Bt,C,HW)
# ---------------------------------------------------------------------------
def _fused_cfg_kernel(scale_ref, *refs, has_mask):
    if has_mask:
        (x_ref, cin_ref, uncond_ref, cond_ref, w_ref, wc_ref, b_ref,
         mask_ref, x0_ref, o_ref) = refs
    else:
        (x_ref, cin_ref, uncond_ref, cond_ref,
         w_ref, wc_ref, b_ref, o_ref) = refs

    f32 = jnp.float32
    s = scale_ref[0]                                  # cond_scale (SMEM scalar)

    x = x_ref[...].astype(f32)                        # (Bt, C, HW)
    n_ch = x.shape[1]

    # k-diffusion input scale folded into the tiny per-sample weight instead of
    # scaling the full (Bt, C, HW) tile:  h = W @ (c_in * x) = (c_in * W) @ x.
    cin = cin_ref[...].astype(f32)                    # (Bt, 1, 1)
    ws = w_ref[...].astype(f32)[None] * cin           # (Bt, C, C)  -- tiny

    # 1x1 channel mix as unrolled VPU broadcast-FMAs; computed ONCE per sample
    # since x/sigma are identical across the two CFG branches.
    # TODO(synk): at realistic channel counts (C >= ~32) switch this loop to
    # jnp.einsum('bij,bjl->bil', ws, x, preferred_element_type=f32) on the MXU.
    h = ws[:, :, 0:1] * x[:, 0:1, :]
    for j in range(1, n_ch):
        h = h + ws[:, :, j:j + 1] * x[:, j:j + 1, :]

    # Pooled text conditioning, hoisted out of the per-pixel path.  CFG
    # guidance is applied to the pooled mean BEFORE the projection (linear =>
    # identical math, one projection / lane-reduce instead of two).
    u_mean = jnp.mean(uncond_ref[...].astype(f32), axis=1, keepdims=True)  # (Bt,1,Dc)
    c_mean = jnp.mean(cond_ref[...].astype(f32), axis=1, keepdims=True)    # (Bt,1,Dc)
    g_mean = u_mean + (c_mean - u_mean) * s                                # guided mean
    wc = wc_ref[...].astype(f32)[None]                                     # (1,C,Dc)
    cemb = jnp.sum(wc * g_mean, axis=2, keepdims=True)                     # (Bt,C,1)

    den = h + cemb + b_ref[...].astype(f32)[None]                          # (Bt,C,HW)

    if has_mask:
        m = mask_ref[...].astype(f32)                  # (Bt, 1|C, HW) - broadcast over C
        x0 = x0_ref[...].astype(f32)                   # (Bt, C, HW)
        den = x0 + m * (den - x0)                      # == x0*(1-m) + m*den

    o_ref[...] = den.astype(o_ref.dtype)


def _pick_batch_tile(B, per_sample_bytes, *, cap_bytes=2 << 20, min_steps=2):
    """Largest divisor of B s.t. each per-stream block stays <= cap_bytes and
    (when B allows) at least `min_steps` grid steps remain.

    min_steps=2 keeps both v7x TensorCores busy via dimension_semantics
    ('parallel'); on single-TC chips (v5e/v6e) the one extra ~0.35us step this
    costs is negligible.  The byte cap keeps the 3-4 double-buffered
    tile-streams well under the scoped-VMEM default on every generation.
    """
    best = 1
    for bt in range(1, B + 1):
        if B % bt:
            continue
        if bt * per_sample_bytes > cap_bytes or (B // bt) < min(min_steps, B):
            break
        best = bt
    return best


def cfg_masked_denoiser_forward(x, sigma, uncond, cond, cond_scale,
                                mask, x0, xi, params):
    del xi  # accepted but unused, matching the PyTorch forward
    W, Wc, bias = params
    B, C, H, Wd = x.shape
    HW = H * Wd
    Tc, Dc = uncond.shape[1:]
    has_mask = mask is not None

    # Batch tile / grid: amortize the ~600-cycle-per-step pipeline overhead
    # with multi-sample blocks while keeping >= 2 parallel steps for v7x.
    Bt = _pick_batch_tile(B, C * HW * x.dtype.itemsize)
    grid = (B // Bt,)

    # Natural lane-dense packing: last dim = HW (large multiple of 128 here),
    # block = full (C, HW) slab per sample -> unmasked, wide output stores.
    x_p = x.reshape(B, C, HW)
    c_in = (1.0 / jnp.sqrt(sigma.astype(jnp.float32) ** 2 + 1.0)).reshape(B, 1, 1)
    scale_sm = jnp.full((1,), cond_scale, jnp.float32)

    w_f = W.astype(jnp.float32)        # (C, C)   tiny params, f32 once
    wc_f = Wc.astype(jnp.float32)      # (C, Dc)
    b_f = bias.astype(jnp.float32)     # (C, 1)

    def blk_sample(i, scale_sref):
        return (i, 0, 0)

    def blk_param(i, scale_sref):
        return (0, 0)

    inputs = [x_p, c_in, uncond, cond, w_f, wc_f, b_f]
    in_specs = [
        pl.BlockSpec((Bt, C, HW), blk_sample),
        pl.BlockSpec((Bt, 1, 1), blk_sample),
        pl.BlockSpec((Bt, Tc, Dc), blk_sample),
        pl.BlockSpec((Bt, Tc, Dc), blk_sample),
        pl.BlockSpec((C, C), blk_param),
        pl.BlockSpec((C, Dc), blk_param),
        pl.BlockSpec((C, 1), blk_param),
    ]

    if has_mask:
        assert x0 is not None
        Mc = mask.shape[1]
        assert Mc in (1, C), "mask must be (B,1,H,W) or (B,C,H,W)"
        # Do NOT pre-broadcast the mask over channels in HBM; the kernel
        # broadcasts it for free.
        mask_p = mask.reshape(B, Mc, HW)
        x0_p = x0.reshape(B, C, HW)
        inputs += [mask_p, x0_p]
        in_specs += [pl.BlockSpec((Bt, Mc, HW), blk_sample),
                     pl.BlockSpec((Bt, C, HW), blk_sample)]

    kernel = functools.partial(_fused_cfg_kernel, has_mask=has_mask)

    out = pl.pallas_call(
        kernel,
        out_shape=jax.ShapeDtypeStruct((B, C, HW), x.dtype),
        grid_spec=pltpu.PrefetchScalarGridSpec(
            num_scalar_prefetch=1,                 # cond_scale -> SMEM
            grid=grid,
            in_specs=in_specs,
            out_specs=pl.BlockSpec((Bt, C, HW), blk_sample),
        ),
        compiler_params=pltpu.CompilerParams(
            dimension_semantics=("parallel",)),    # batch-tile axis across TCs
    )(scale_sm, *inputs)

    return out.reshape(B, C, H, Wd)


# ---------------------------------------------------------------------------
# Pure-JAX reference (same math as the PyTorch forward, incl. batch doubling)
# ---------------------------------------------------------------------------
def cfg_masked_ref(x, sigma, uncond, cond, cond_scale, mask, x0, params):
    W, Wc, bias = params
    B, C, H, Wd = x.shape
    x_in = jnp.concatenate([x, x], 0).reshape(2 * B, C, H * Wd)
    sigma_in = jnp.concatenate([sigma, sigma], 0)
    cond_in = jnp.concatenate([uncond, cond], 0)

    c_in = 1.0 / jnp.sqrt(sigma_in ** 2 + 1.0)
    h = jnp.einsum('oc,ncs->nos', W, x_in * c_in[:, None, None])
    cemb = jnp.mean(cond_in, axis=1) @ Wc.T
    den = h + cemb[:, :, None] + bias[None]

    u, c = den[:B], den[B:]
    denoised = (u + (c - u) * cond_scale).reshape(B, C, H, Wd)
    if mask is not None:
        denoised = x0 * (1.0 - mask) + mask * denoised
    return denoised


if __name__ == "__main__":
    B, C, H, Wd = 2, 4, 16, 16        # latent x: (B, C, H, W)  NCHW
    Tc, Dc = 8, 32                    # conditioning: (B, seq, hidden)
    key = jax.random.PRNGKey(0)
    k = jax.random.split(key, 9)

    x = jax.random.normal(k[0], (B, C, H, Wd), jnp.float32)
    sigma = jax.random.uniform(k[1], (B,), jnp.float32, 0.5, 5.0)
    uncond = jax.random.normal(k[2], (B, Tc, Dc), jnp.float32)
    cond = jax.random.normal(k[3], (B, Tc, Dc), jnp.float32)
    cond_scale = 7.5
    mask = (jax.random.uniform(k[7], (B, 1, H, Wd), jnp.float32) > 0.5
            ).astype(jnp.float32)
    x0 = jax.random.normal(k[8], (B, C, H, Wd), jnp.float32)

    # Deterministic synthetic inner-model parameters.
    W = jax.random.normal(k[4], (C, C), jnp.float32) / jnp.sqrt(C)
    Wc = jax.random.normal(k[5], (C, Dc), jnp.float32) / jnp.sqrt(Dc)
    bias = jax.random.normal(k[6], (C, 1), jnp.float32) * 0.1
    params = (W, Wc, bias)

    fwd = jax.jit(cfg_masked_denoiser_forward)

    # Masked (inpainting) path.
    out = jax.block_until_ready(
        fwd(x, sigma, uncond, cond, cond_scale, mask, x0, None, params))
    ref = cfg_masked_ref(x, sigma, uncond, cond, cond_scale, mask, x0, params)
    assert out.shape == (B, C, H, Wd)
    assert jnp.allclose(out, ref, atol=1e-4, rtol=1e-4)

    # Unmasked path (mask is None).
    out_nm = jax.block_until_ready(
        fwd(x, sigma, uncond, cond, cond_scale, None, None, None, params))
    ref_nm = cfg_masked_ref(x, sigma, uncond, cond, cond_scale, None, None, params)
    assert jnp.allclose(out_nm, ref_nm, atol=1e-4, rtol=1e-4)

    print("KERNEL_OK")
</pallas_src>

<mosaic_0001>
module attributes {stable_mosaic.version = 11 : i64} {
  func.func @_fused_cfg_kernel(%arg0: i32, %arg1: memref<1xf32, #tpu.memory_space<smem>>, %arg2: memref<1x4x256xf32, #tpu.memory_space<vmem>>, %arg3: memref<1x1x1xf32, #tpu.memory_space<vmem>>, %arg4: memref<1x8x32xf32, #tpu.memory_space<vmem>>, %arg5: memref<1x8x32xf32, #tpu.memory_space<vmem>>, %arg6: memref<4x4xf32, #tpu.memory_space<vmem>>, %arg7: memref<4x32xf32, #tpu.memory_space<vmem>>, %arg8: memref<4x1xf32, #tpu.memory_space<vmem>>, %arg9: memref<1x1x256xf32, #tpu.memory_space<vmem>>, %arg10: memref<1x4x256xf32, #tpu.memory_space<vmem>>, %arg11: memref<1x4x256xf32, #tpu.memory_space<vmem>>) attributes {dimension_semantics = [#tpu.dimension_semantics<parallel>], iteration_bounds = array<i64: 2>, scalar_prefetch = 1 : i64, scratch_operands = 0 : i64, tpu.core_type = #tpu.core_type<tc>, window_params = [{transform_indices = @transform_0, window_bounds = array<i64: 1, 4, 256>}, {transform_indices = @transform_1, window_bounds = array<i64: 1, 1, 1>}, {transform_indices = @transform_2, window_bounds = array<i64: 1, 8, 32>}, {transform_indices = @transform_3, window_bounds = array<i64: 1, 8, 32>}, {pipeline_mode = #tpu.pipeline_mode<synchronous>, transform_indices = @transform_4, window_bounds = array<i64: 4, 4>}, {pipeline_mode = #tpu.pipeline_mode<synchronous>, transform_indices = @transform_5, window_bounds = array<i64: 4, 32>}, {pipeline_mode = #tpu.pipeline_mode<synchronous>, transform_indices = @transform_6, window_bounds = array<i64: 4, 1>}, {transform_indices = @transform_7, window_bounds = array<i64: 1, 1, 256>}, {transform_indices = @transform_8, window_bounds = array<i64: 1, 4, 256>}, {transform_indices = @transform_9, window_bounds = array<i64: 1, 4, 256>}]} {
    %c0 = arith.constant 0 : index
    %0 = memref.load %arg1[%c0] : memref<1xf32, #tpu.memory_space<smem>>
    %c0_0 = arith.constant 0 : index
    %c0_1 = arith.constant 0 : index
    %c0_2 = arith.constant 0 : index
    %1 = vector.load %arg2[%c0_0, %c0_1, %c0_2] : memref<1x4x256xf32, #tpu.memory_space<vmem>>, vector<1x4x256xf32>
    %c0_3 = arith.constant 0 : index
    %c0_4 = arith.constant 0 : index
    %c0_5 = arith.constant 0 : index
    %2 = vector.load %arg3[%c0_3, %c0_4, %c0_5] : memref<1x1x1xf32, #tpu.memory_space<vmem>>, vector<1x1x1xf32>
    %c0_6 = arith.constant 0 : index
    %c0_7 = arith.constant 0 : index
    %3 = vector.load %arg6[%c0_6, %c0_7] : memref<4x4xf32, #tpu.memory_space<vmem>>, vector<4x4xf32>
    %4 = vector.shape_cast %3 : vector<4x4xf32> to vector<1x4x4xf32>
    %5 = vector.broadcast %2 : vector<1x1x1xf32> to vector<1x4x4xf32>
    %6 = arith.mulf %4, %5 : vector<1x4x4xf32>
    %7 = vector.extract_strided_slice %6 {offsets = [0, 0, 0], sizes = [1, 4, 1], strides = [1, 1, 1]} : vector<1x4x4xf32> to vector<1x4x1xf32>
    %8 = vector.extract_strided_slice %1 {offsets = [0, 0, 0], sizes = [1, 1, 256], strides = [1, 1, 1]} : vector<1x4x256xf32> to vector<1x1x256xf32>
    %9 = vector.broadcast %7 : vector<1x4x1xf32> to vector<1x4x256xf32>
    %10 = vector.broadcast %8 : vector<1x1x256xf32> to vector<1x4x256xf32>
    %11 = arith.mulf %9, %10 : vector<1x4x256xf32>
    %12 = vector.extract_strided_slice %6 {offsets = [0, 0, 1], sizes = [1, 4, 1], strides = [1, 1, 1]} : vector<1x4x4xf32> to vector<1x4x1xf32>
    %13 = vector.extract_strided_slice %1 {offsets = [0, 1, 0], sizes = [1, 1, 256], strides = [1, 1, 1]} : vector<1x4x256xf32> to vector<1x1x256xf32>
    %14 = vector.broadcast %12 : vector<1x4x1xf32> to vector<1x4x256xf32>
    %15 = vector.broadcast %13 : vector<1x1x256xf32> to vector<1x4x256xf32>
    %16 = arith.mulf %14, %15 : vector<1x4x256xf32>
    %17 = arith.addf %11, %16 : vector<1x4x256xf32>
    %18 = vector.extract_strided_slice %6 {offsets = [0, 0, 2], sizes = [1, 4, 1], strides = [1, 1, 1]} : vector<1x4x4xf32> to vector<1x4x1xf32>
    %19 = vector.extract_strided_slice %1 {offsets = [0, 2, 0], sizes = [1, 1, 256], strides = [1, 1, 1]} : vector<1x4x256xf32> to vector<1x1x256xf32>
    %20 = vector.broadcast %18 : vector<1x4x1xf32> to vector<1x4x256xf32>
    %21 = vector.broadcast %19 : vector<1x1x256xf32> to vector<1x4x256xf32>
    %22 = arith.mulf %20, %21 : vector<1x4x256xf32>
    %23 = arith.addf %17, %22 : vector<1x4x256xf32>
    %24 = vector.extract_strided_slice %6 {offsets = [0, 0, 3], sizes = [1, 4, 1], strides = [1, 1, 1]} : vector<1x4x4xf32> to vector<1x4x1xf32>
    %25 = vector.extract_strided_slice %1 {offsets = [0, 3, 0], sizes = [1, 1, 256], strides = [1, 1, 1]} : vector<1x4x256xf32> to vector<1x1x256xf32>
    %26 = vector.broadcast %24 : vector<1x4x1xf32> to vector<1x4x256xf32>
    %27 = vector.broadcast %25 : vector<1x1x256xf32> to vector<1x4x256xf32>
    %28 = arith.mulf %26, %27 : vector<1x4x256xf32>
    %29 = arith.addf %23, %28 : vector<1x4x256xf32>
    %c0_8 = arith.constant 0 : index
    %c0_9 = arith.constant 0 : index
    %c0_10 = arith.constant 0 : index
    %30 = vector.load %arg4[%c0_8, %c0_9, %c0_10] : memref<1x8x32xf32, #tpu.memory_space<vmem>>, vector<1x8x32xf32>
    %cst = arith.constant dense<0.000000e+00> : vector<1x32xf32>
    %31 = vector.multi_reduction <add>, %30, %cst [1] : vector<1x8x32xf32> to vector<1x32xf32>
    %32 = vector.shape_cast %31 : vector<1x32xf32> to vector<1x1x32xf32>
    %cst_11 = arith.constant 8.000000e+00 : f32
    %33 = vector.broadcast %cst_11 : f32 to vector<1x1x32xf32>
    %34 = arith.divf %32, %33 : vector<1x1x32xf32>
    %c0_12 = arith.constant 0 : index
    %c0_13 = arith.constant 0 : index
    %c0_14 = arith.constant 0 : index
    %35 = vector.load %arg5[%c0_12, %c0_13, %c0_14] : memref<1x8x32xf32, #tpu.memory_space<vmem>>, vector<1x8x32xf32>
    %cst_15 = arith.constant dense<0.000000e+00> : vector<1x32xf32>
    %36 = vector.multi_reduction <add>, %35, %cst_15 [1] : vector<1x8x32xf32> to vector<1x32xf32>
    %37 = vector.shape_cast %36 : vector<1x32xf32> to vector<1x1x32xf32>
    %cst_16 = arith.constant 8.000000e+00 : f32
    %38 = vector.broadcast %cst_16 : f32 to vector<1x1x32xf32>
    %39 = arith.divf %37, %38 : vector<1x1x32xf32>
    %40 = arith.subf %39, %34 : vector<1x1x32xf32>
    %41 = vector.broadcast %0 : f32 to vector<1x1x32xf32>
    %42 = arith.mulf %40, %41 : vector<1x1x32xf32>
    %43 = arith.addf %34, %42 : vector<1x1x32xf32>
    %c0_17 = arith.constant 0 : index
    %c0_18 = arith.constant 0 : index
    %44 = vector.load %arg7[%c0_17, %c0_18] : memref<4x32xf32, #tpu.memory_space<vmem>>, vector<4x32xf32>
    %45 = vector.shape_cast %44 : vector<4x32xf32> to vector<1x4x32xf32>
    %46 = vector.broadcast %43 : vector<1x1x32xf32> to vector<1x4x32xf32>
    %47 = arith.mulf %45, %46 : vector<1x4x32xf32>
    %cst_19 = arith.constant dense<0.000000e+00> : vector<1x4xf32>
    %48 = vector.multi_reduction <add>, %47, %cst_19 [2] : vector<1x4x32xf32> to vector<1x4xf32>
    %49 = vector.shape_cast %48 : vector<1x4xf32> to vector<1x4x1xf32>
    %50 = vector.broadcast %49 : vector<1x4x1xf32> to vector<1x4x256xf32>
    %51 = arith.addf %29, %50 : vector<1x4x256xf32>
    %c0_20 = arith.constant 0 : index
    %c0_21 = arith.constant 0 : index
    %52 = vector.load %arg8[%c0_20, %c0_21] : memref<4x1xf32, #tpu.memory_space<vmem>>, vector<4x1xf32>
    %53 = vector.shape_cast %52 : vector<4x1xf32> to vector<1x4x1xf32>
    %54 = vector.broadcast %53 : vector<1x4x1xf32> to vector<1x4x256xf32>
    %55 = arith.addf %51, %54 : vector<1x4x256xf32>
    %c0_22 = arith.constant 0 : index
    %c0_23 = arith.constant 0 : index
    %c0_24 = arith.constant 0 : index
    %56 = vector.load %arg9[%c0_22, %c0_23, %c0_24] : memref<1x1x256xf32, #tpu.memory_space<vmem>>, vector<1x1x256xf32>
    %c0_25 = arith.constant 0 : index
    %c0_26 = arith.constant 0 : index
    %c0_27 = arith.constant 0 : index
    %57 = vector.load %arg10[%c0_25, %c0_26, %c0_27] : memref<1x4x256xf32, #tpu.memory_space<vmem>>, vector<1x4x256xf32>
    %58 = arith.subf %55, %57 : vector<1x4x256xf32>
    %59 = vector.broadcast %56 : vector<1x1x256xf32> to vector<1x4x256xf32>
    %60 = arith.mulf %59, %58 : vector<1x4x256xf32>
    %61 = arith.addf %57, %60 : vector<1x4x256xf32>
    %c0_28 = arith.constant 0 : index
    %c0_29 = arith.constant 0 : index
    %c0_30 = arith.constant 0 : index
    %62 = vector.load %arg11[%c0_28, %c0_29, %c0_30] : memref<1x4x256xf32, #tpu.memory_space<vmem>>, vector<1x4x256xf32>
    tpu.vector_store %arg11[%c0_28, %c0_29, %c0_30], %61 {strides = array<i32>} : memref<1x4x256xf32, #tpu.memory_space<vmem>>, vector<1x4x256xf32>,
    return
  }
  func.func @transform_0(%arg0: i32, %arg1: memref<1xf32, #tpu.memory_space<smem>>) -> (i32, i32, i32) {
    %c0_i32 = arith.constant 0 : i32
    %c0_i32_0 = arith.constant 0 : i32
    %c0_i32_1 = arith.constant 0 : i32
    return %arg0, %c0_i32, %c0_i32_0 : i32, i32, i32
  }
  func.func @transform_1(%arg0: i32, %arg1: memref<1xf32, #tpu.memory_space<smem>>) -> (i32, i32, i32) {
    %c0_i32 = arith.constant 0 : i32
    %c0_i32_0 = arith.constant 0 : i32
    %c0_i32_1 = arith.constant 0 : i32
    return %arg0, %c0_i32, %c0_i32_0 : i32, i32, i32
  }
  func.func @transform_2(%arg0: i32, %arg1: memref<1xf32, #tpu.memory_space<smem>>) -> (i32, i32, i32) {
    %c0_i32 = arith.constant 0 : i32
    %c0_i32_0 = arith.constant 0 : i32
    %c0_i32_1 = arith.constant 0 : i32
    return %arg0, %c0_i32, %c0_i32_0 : i32, i32, i32
  }
  func.func @transform_3(%arg0: i32, %arg1: memref<1xf32, #tpu.memory_space<smem>>) -> (i32, i32, i32) {
    %c0_i32 = arith.constant 0 : i32
    %c0_i32_0 = arith.constant 0 : i32
    %c0_i32_1 = arith.constant 0 : i32
    return %arg0, %c0_i32, %c0_i32_0 : i32, i32, i32
  }
  func.func @transform_4(%arg0: i32, %arg1: memref<1xf32, #tpu.memory_space<smem>>) -> (i32, i32) {
    %c0_i32 = arith.constant 0 : i32
    %c0_i32_0 = arith.constant 0 : i32
    %c0_i32_1 = arith.constant 0 : i32
    return %c0_i32, %c0_i32_0 : i32, i32
  }
  func.func @transform_5(%arg0: i32, %arg1: memref<1xf32, #tpu.memory_space<smem>>) -> (i32, i32) {
    %c0_i32 = arith.constant 0 : i32
    %c0_i32_0 = arith.constant 0 : i32
    %c0_i32_1 = arith.constant 0 : i32
    return %c0_i32, %c0_i32_0 : i32, i32
  }
  func.func @transform_6(%arg0: i32, %arg1: memref<1xf32, #tpu.memory_space<smem>>) -> (i32, i32) {
    %c0_i32 = arith.constant 0 : i32
    %c0_i32_0 = arith.constant 0 : i32
    %c0_i32_1 = arith.constant 0 : i32
    return %c0_i32, %c0_i32_0 : i32, i32
  }
  func.func @transform_7(%arg0: i32, %arg1: memref<1xf32, #tpu.memory_space<smem>>) -> (i32, i32, i32) {
    %c0_i32 = arith.constant 0 : i32
    %c0_i32_0 = arith.constant 0 : i32
    %c0_i32_1 = arith.constant 0 : i32
    return %arg0, %c0_i32, %c0_i32_0 : i32, i32, i32
  }
  func.func @transform_8(%arg0: i32, %arg1: memref<1xf32, #tpu.memory_space<smem>>) -> (i32, i32, i32) {
    %c0_i32 = arith.constant 0 : i32
    %c0_i32_0 = arith.constant 0 : i32
    %c0_i32_1 = arith.constant 0 : i32
    return %arg0, %c0_i32, %c0_i32_0 : i32, i32, i32
  }
  func.func @transform_9(%arg0: i32, %arg1: memref<1xf32, #tpu.memory_space<smem>>) -> (i32, i32, i32) {
    %c0_i32 = arith.constant 0 : i32
    %c0_i32_0 = arith.constant 0 : i32
    %c0_i32_1 = arith.constant 0 : i32
    return %arg0, %c0_i32, %c0_i32_0 : i32, i32, i32
  }
}

</mosaic_0001>

<llo_original>
// kernel: cfg_masked_denoiser_forward.1
$region0: #{cfg_masked_denoiser_forward.1}
  #allocation0 [shape = 'u32[]', space=smem, size = 0x4, offset = 0x4, fixed_abs, tag = 'smem constant byte address 0x4 - core index']
  #allocation1 [shape = 'u32[144,128]{1,0:T(1,128)}', space=vmem, size = 0x12000, scoped, tag = 'internal scratch']
  #allocation2 [shape = 's32[1]{0}', space=sflag, size = 0x4, scoped, tag = 'scoped memory for cfg_masked_denoiser_forward.1']
  #allocation3 [shape = 'f32[1]{0:T(128)S(6)}', space=smem, size = 0x200, scoped, tag = 'prefetched SMEM operand 0']
  %s0 = inlined_call_operand.<no memory space> [shape: f32[1], index: 0, kind: input, shape index: {}]
  %s1 = inlined_call_operand.vmem [shape: f32[2,4,256], index: 1, kind: input, shape index: {}]
  %s2 = inlined_call_operand.vmem [shape: f32[2,1,1], index: 2, kind: input, shape index: {}]
  %s3 = inlined_call_operand.vmem [shape: f32[2,8,32], index: 3, kind: input, shape index: {}]
  %s4 = inlined_call_operand.vmem [shape: f32[2,8,32], index: 4, kind: input, shape index: {}]
  %s5 = inlined_call_operand.vmem [shape: f32[4,4], index: 5, kind: input, shape index: {}]
  %s6 = inlined_call_operand.vmem [shape: f32[4,32], index: 6, kind: input, shape index: {}]
  %s7 = inlined_call_operand.vmem [shape: f32[4,1], index: 7, kind: input, shape index: {}]
  %s8 = inlined_call_operand.vmem [shape: f32[2,1,256], index: 8, kind: input, shape index: {}]
  %s9 = inlined_call_operand.vmem [shape: f32[2,4,256], index: 9, kind: input, shape index: {}]
  %s10 = inlined_call_operand.vmem [shape: f32[2,4,256], index: 10, kind: output, shape index: {}]
  %s11 = sld [smem:[#allocation0]]
  $region69: #{cfg_masked_denoiser_forward.1} parent=0
    _
  %s13 = ssub.s32 1, %s11
  %s14 = scalar_select 0, %s13, %s11
  %15 = sst [smem:[#allocation3]] %s0
  loop: start=0, step=1, limit=4
  $region2: #{cfg_masked_denoiser_forward.1} parent=0 // loop_pre_header
    _
  $region3: #{cfg_masked_denoiser_forward.1} parent=0 // loop_header
    %s17 = sphi 0, %s21
    %p18 = scmp.ge.s32.totalorder %s17, 4
    %s27 = sphi 0, %s29
    %s30 = sphi 0, %s27
    %s31 = sphi 0, %s30
    %s47 = sphi 0, %s31
    %s53 = sphi 0, %s55
    %s56 = sphi 0, %s53
    %s57 = sphi 0, %s56
    %s73 = sphi 0, %s57
    %s79 = sphi 0, %s81
    %s82 = sphi 0, %s79
    %s83 = sphi 0, %s82
    %s99 = sphi 0, %s83
    %s105 = sphi 0, %s107
    %s108 = sphi 0, %s105
    %s109 = sphi 0, %s108
    %s125 = sphi 0, %s109
    %s129 = sphi 0, %s129
    %s131 = sphi 0, %s129
    %s132 = sphi 0, %s131
    %s146 = sphi 0, %s132
    %s150 = sphi 0, %s150
    %s152 = sphi 0, %s150
    %s153 = sphi 0, %s152
    %s167 = sphi 0, %s153
    %s171 = sphi 0, %s171
    %s173 = sphi 0, %s171
    %s174 = sphi 0, %s173
    %s188 = sphi 0, %s174
    %s194 = sphi 0, %s196
    %s197 = sphi 0, %s194
    %s198 = sphi 0, %s197
    %s214 = sphi 0, %s198
    %s220 = sphi 0, %s222
    %s223 = sphi 0, %s220
    %s224 = sphi 0, %s223
    %s240 = sphi 0, %s224
    %s246 = sphi 0, %s248
    %s249 = sphi 0, %s246
    %s250 = sphi 0, %s249
    %s266 = sphi 0, %s250
  $region4: #{cfg_masked_denoiser_forward.1} parent=0 // loop_header_branch
    %20 = sbr.rel (%p18) target = $region8
  $region5: #{cfg_masked_denoiser_forward.1} parent=0 // loop_body
    %s22 = ssub.s32 %s17, 1
    %s23 = ssub.s32 %s17, 2
    %s24 = sadd.s32 %s17, 1
    %s25 = ssub.s32 %s17, %s24
    %p26 = scmp.eq.s32.totalorder %s25, 0
    %s28 = sadd.s32 %s27, 1
    %s29 = scalar_select %p26, %s27, %s28
    %p32 = pneg %p26
    %p33 = scmp.eq.s32.totalorder %s17, 1
    %p34 = por %p32, %p33
    %p35 = scmp.ne.s32.totalorder %s27, %s30
    %p36 = scmp.eq.s32.totalorder %s17, 0
    %p37 = por %p35, %p36
    %p38 = scmp.ne.s32.totalorder %s27, %s30
    %p39 = scmp.eq.s32.totalorder %s22, 1
    %p40 = por %p38, %p39
    %p41 = scmp.ne.s32.totalorder %s30, %s31
    %p42 = scmp.eq.s32.totalorder %s22, 0
    %p43 = por %p41, %p42
    %p44 = scmp.ne.s32.totalorder %s30, %s31
    %p45 = scmp.eq.s32.totalorder %s23, 1
    %p46 = por %p44, %p45
    %p48 = scmp.ne.s32.totalorder %s31, %s47
    %p49 = scmp.eq.s32.totalorder %s23, 0
    %p50 = por %p48, %p49
    %s51 = ssub.s32 %s17, %s24
    %p52 = scmp.eq.s32.totalorder %s51, 0
    %s54 = sadd.s32 %s53, 1
    %s55 = scalar_select %p52, %s53, %s54
    %p58 = pneg %p52
    %p59 = scmp.eq.s32.totalorder %s17, 1
    %p60 = por %p58, %p59
    %p61 = scmp.ne.s32.totalorder %s53, %s56
    %p62 = scmp.eq.s32.totalorder %s17, 0
    %p63 = por %p61, %p62
    %p64 = scmp.ne.s32.totalorder %s53, %s56
    %p65 = scmp.eq.s32.totalorder %s22, 1
    %p66 = por %p64, %p65
    %p67 = scmp.ne.s32.totalorder %s56, %s57
    %p68 = scmp.eq.s32.totalorder %s22, 0
    %p69 = por %p67, %p68
    %p70 = scmp.ne.s32.totalorder %s56, %s57
    %p71 = scmp.eq.s32.totalorder %s23, 1
    %p72 = por %p70, %p71
    %p74 = scmp.ne.s32.totalorder %s57, %s73
    %p75 = scmp.eq.s32.totalorder %s23, 0
    %p76 = por %p74, %p75
    %s77 = ssub.s32 %s17, %s24
    %p78 = scmp.eq.s32.totalorder %s77, 0
    %s80 = sadd.s32 %s79, 1
    %s81 = scalar_select %p78, %s79, %s80
    %p84 = pneg %p78
    %p85 = scmp.eq.s32.totalorder %s17, 1
    %p86 = por %p84, %p85
    %p87 = scmp.ne.s32.totalorder %s79, %s82
    %p88 = scmp.eq.s32.totalorder %s17, 0
    %p89 = por %p87, %p88
    %p90 = scmp.ne.s32.totalorder %s79, %s82
    %p91 = scmp.eq.s32.totalorder %s22, 1
    %p92 = por %p90, %p91
    %p93 = scmp.ne.s32.totalorder %s82, %s83
    %p94 = scmp.eq.s32.totalorder %s22, 0
    %p95 = por %p93, %p94
    %p96 = scmp.ne.s32.totalorder %s82, %s83
    %p97 = scmp.eq.s32.totalorder %s23, 1
    %p98 = por %p96, %p97
    %p100 = scmp.ne.s32.totalorder %s83, %s99
    %p101 = scmp.eq.s32.totalorder %s23, 0
    %p102 = por %p100, %p101
    %s103 = ssub.s32 %s17, %s24
    %p104 = scmp.eq.s32.totalorder %s103, 0
    %s106 = sadd.s32 %s105, 1
    %s107 = scalar_select %p104, %s105, %s106
    %p110 = pneg %p104
    %p111 = scmp.eq.s32.totalorder %s17, 1
    %p112 = por %p110, %p111
    %p113 = scmp.ne.s32.totalorder %s105, %s108
    %p114 = scmp.eq.s32.totalorder %s17, 0
    %p115 = por %p113, %p114
    %p116 = scmp.ne.s32.totalorder %s105, %s108
    %p117 = scmp.eq.s32.totalorder %s22, 1
    %p118 = por %p116, %p117
    %p119 = scmp.ne.s32.totalorder %s108, %s109
    %p120 = scmp.eq.s32.totalorder %s22, 0
    %p121 = por %p119, %p120
    %p122 = scmp.ne.s32.totalorder %s108, %s109
    %p123 = scmp.eq.s32.totalorder %s23, 1
    %p124 = por %p122, %p123
    %p126 = scmp.ne.s32.totalorder %s109, %s125
    %p127 = scmp.eq.s32.totalorder %s23, 0
    %p128 = por %p126, %p127
    %s130 = sadd.s32 %s129, 1
    %p133 = scmp.eq.s32.totalorder %s17, 1
    %p134 = scmp.ne.s32.totalorder %s129, %s131
    %p135 = scmp.eq.s32.totalorder %s17, 0
    %p136 = por %p134, %p135
    %p137 = scmp.ne.s32.totalorder %s129, %s131
    %p138 = scmp.eq.s32.totalorder %s22, 1
    %p139 = por %p137, %p138
    %p140 = scmp.ne.s32.totalorder %s131, %s132
    %p141 = scmp.eq.s32.totalorder %s22, 0
    %p142 = por %p140, %p141
    %p143 = scmp.ne.s32.totalorder %s131, %s132
    %p144 = scmp.eq.s32.totalorder %s23, 1
    %p145 = por %p143, %p144
    %p147 = scmp.ne.s32.totalorder %s132, %s146
    %p148 = scmp.eq.s32.totalorder %s23, 0
    %p149 = por %p147, %p148
    %s151 = sadd.s32 %s150, 1
    %p154 = scmp.eq.s32.totalorder %s17, 1
    %p155 = scmp.ne.s32.totalorder %s150, %s152
    %p156 = scmp.eq.s32.totalorder %s17, 0
    %p157 = por %p155, %p156
    %p158 = scmp.ne.s32.totalorder %s150, %s152
    %p159 = scmp.eq.s32.totalorder %s22, 1
    %p160 = por %p158, %p159
    %p161 = scmp.ne.s32.totalorder %s152, %s153
    %p162 = scmp.eq.s32.totalorder %s22, 0
    %p163 = por %p161, %p162
    %p164 = scmp.ne.s32.totalorder %s152, %s153
    %p165 = scmp.eq.s32.totalorder %s23, 1
    %p166 = por %p164, %p165
    %p168 = scmp.ne.s32.totalorder %s153, %s167
    %p169 = scmp.eq.s32.totalorder %s23, 0
    %p170 = por %p168, %p169
    %s172 = sadd.s32 %s171, 1
    %p175 = scmp.eq.s32.totalorder %s17, 1
    %p176 = scmp.ne.s32.totalorder %s171, %s173
    %p177 = scmp.eq.s32.totalorder %s17, 0
    %p178 = por %p176, %p177
    %p179 = scmp.ne.s32.totalorder %s171, %s173
    %p180 = scmp.eq.s32.totalorder %s22, 1
    %p181 = por %p179, %p180
    %p182 = scmp.ne.s32.totalorder %s173, %s174
    %p183 = scmp.eq.s32.totalorder %s22, 0
    %p184 = por %p182, %p183
    %p185 = scmp.ne.s32.totalorder %s173, %s174
    %p186 = scmp.eq.s32.totalorder %s23, 1
    %p187 = por %p185, %p186
    %p189 = scmp.ne.s32.totalorder %s174, %s188
    %p190 = scmp.eq.s32.totalorder %s23, 0
    %p191 = por %p189, %p190
    %s192 = ssub.s32 %s17, %s24
    %p193 = scmp.eq.s32.totalorder %s192, 0
    %s195 = sadd.s32 %s194, 1
    %s196 = scalar_select %p193, %s194, %s195
    %p199 = pneg %p193
    %p200 = scmp.eq.s32.totalorder %s17, 1
    %p201 = por %p199, %p200
    %p202 = scmp.ne.s32.totalorder %s194, %s197
    %p203 = scmp.eq.s32.totalorder %s17, 0
    %p204 = por %p202, %p203
    %p205 = scmp.ne.s32.totalorder %s194, %s197
    %p206 = scmp.eq.s32.totalorder %s22, 1
    %p207 = por %p205, %p206
    %p208 = scmp.ne.s32.totalorder %s197, %s198
    %p209 = scmp.eq.s32.totalorder %s22, 0
    %p210 = por %p208, %p209
    %p211 = scmp.ne.s32.totalorder %s197, %s198
    %p212 = scmp.eq.s32.totalorder %s23, 1
    %p213 = por %p211, %p212
    %p215 = scmp.ne.s32.totalorder %s198, %s214
    %p216 = scmp.eq.s32.totalorder %s23, 0
    %p217 = por %p215, %p216
    %s218 = ssub.s32 %s17, %s24
    %p219 = scmp.eq.s32.totalorder %s218, 0
    %s221 = sadd.s32 %s220, 1
    %s222 = scalar_select %p219, %s220, %s221
    %p225 = pneg %p219
    %p226 = scmp.eq.s32.totalorder %s17, 1
    %p227 = por %p225, %p226
    %p228 = scmp.ne.s32.totalorder %s220, %s223
    %p229 = scmp.eq.s32.totalorder %s17, 0
    %p230 = por %p228, %p229
    %p231 = scmp.ne.s32.totalorder %s220, %s223
    %p232 = scmp.eq.s32.totalorder %s22, 1
    %p233 = por %p231, %p232
    %p234 = scmp.ne.s32.totalorder %s223, %s224
    %p235 = scmp.eq.s32.totalorder %s22, 0
    %p236 = por %p234, %p235
    %p237 = scmp.ne.s32.totalorder %s223, %s224
    %p238 = scmp.eq.s32.totalorder %s23, 1
    %p239 = por %p237, %p238
    %p241 = scmp.ne.s32.totalorder %s224, %s240
    %p242 = scmp.eq.s32.totalorder %s23, 0
    %p243 = por %p241, %p242
    %s244 = ssub.s32 %s17, %s24
    %p245 = scmp.eq.s32.totalorder %s244, 0
    %s247 = sadd.s32 %s246, 1
    %s248 = scalar_select %p245, %s246, %s247
    %p251 = pneg %p245
    %p252 = scmp.eq.s32.totalorder %s17, 1
    %p253 = por %p251, %p252
    %p254 = scmp.ne.s32.totalorder %s246, %s249
    %p255 = scmp.eq.s32.totalorder %s17, 0
    %p256 = por %p254, %p255
    %p257 = scmp.ne.s32.totalorder %s246, %s249
    %p258 = scmp.eq.s32.totalorder %s22, 1
    %p259 = por %p257, %p258
    %p260 = scmp.ne.s32.totalorder %s249, %s250
    %p261 = scmp.eq.s32.totalorder %s22, 0
    %p262 = por %p260, %p261
    %p263 = scmp.ne.s32.totalorder %s249, %s250
    %p264 = scmp.eq.s32.totalorder %s23, 1
    %p265 = por %p263, %p264
    %p267 = scmp.ne.s32.totalorder %s250, %s266
    %p268 = scmp.eq.s32.totalorder %s23, 0
    %p269 = por %p267, %p268
    %p270 = scmp.le.s32.totalorder 1, %s17
    %p271 = scmp.lt.s32.totalorder %s17, 3
    %p272 = pnand %p270, %p271
    %p273 = pneg %p272
    // Predicated region
    $region9: #{cfg_masked_denoiser_forward.1} parent=5 // pred_check
      _
    $region10: #{cfg_masked_denoiser_forward.1} parent=5 // pred_check_branch
      %275 = sbr.rel (%p272) target = $region12
    $region11: #{cfg_masked_denoiser_forward.1} parent=5 // pred_region
      %s276 = ssub.s32 %s17, 1
      // Predicated region
      $region13: #{cfg_masked_denoiser_forward.1} parent=11 // pred_check
        %p277 = pneg %p142
      $region14: #{cfg_masked_denoiser_forward.1} parent=11 // pred_check_branch
        %279 = sbr.rel (%p277) target = $region16
      $region15: #{cfg_masked_denoiser_forward.1} parent=11 // pred_region
        _
      $region16: #{cfg_masked_denoiser_forward.1} parent=11 // pred_fallthru
        _
      // Predicated region
      $region17: #{cfg_masked_denoiser_forward.1} parent=11 // pred_check
        %p280 = pneg %p163
      $region18: #{cfg_masked_denoiser_forward.1} parent=11 // pred_check_branch
        %282 = sbr.rel (%p280) target = $region20
      $region19: #{cfg_masked_denoiser_forward.1} parent=11 // pred_region
        _
      $region20: #{cfg_masked_denoiser_forward.1} parent=11 // pred_fallthru
        _
      // Predicated region
      $region21: #{cfg_masked_denoiser_forward.1} parent=11 // pred_check
        %p283 = pneg %p184
      $region22: #{cfg_masked_denoiser_forward.1} parent=11 // pred_check_branch
        %285 = sbr.rel (%p283) target = $region24
      $region23: #{cfg_masked_denoiser_forward.1} parent=11 // pred_region
        _
      $region24: #{cfg_masked_denoiser_forward.1} parent=11 // pred_fallthru
        _
    $region12: #{cfg_masked_denoiser_forward.1} parent=5 // pred_fallthru
      _
    %p286 = scmp.lt.s32.totalorder %s17, 2
    // Predicated region
    $region25: #{cfg_masked_denoiser_forward.1} parent=5 // pred_check
      %p287 = pneg %p286
    $region26: #{cfg_masked_denoiser_forward.1} parent=5 // pred_check_branch
      %289 = sbr.rel (%p287) target = $region28
    $region27: #{cfg_masked_denoiser_forward.1} parent=5 // pred_region
      // Predicated region
      $region29: #{cfg_masked_denoiser_forward.1} parent=27 // pred_check
        %p290 = pneg %p37
      $region30: #{cfg_masked_denoiser_forward.1} parent=27 // pred_check_branch
        %292 = sbr.rel (%p290) target = $region32
      $region31: #{cfg_masked_denoiser_forward.1} parent=27 // pred_region
        %p293 = scmp.lt.s32.totalorder %s17, 1
        %s294 = scalar_select %p293, %s17, 1
        %s295 = smul.addr %s294, 2
        %s296 = smul.addr %s295, 4
        %s297 = scalar_lea.vmem %s1, %s296
      $region32: #{cfg_masked_denoiser_forward.1} parent=27 // pred_fallthru
        _
      // Predicated region
      $region33: #{cfg_masked_denoiser_forward.1} parent=27 // pred_check
        %p298 = pneg %p63
      $region34: #{cfg_masked_denoiser_forward.1} parent=27 // pred_check_branch
        %300 = sbr.rel (%p298) target = $region36
      $region35: #{cfg_masked_denoiser_forward.1} parent=27 // pred_region
        %p301 = scmp.lt.s32.totalorder %s17, 1
        %s302 = scalar_select %p301, %s17, 1
        %s303 = scalar_lea.vmem %s2, %s302
      $region36: #{cfg_masked_denoiser_forward.1} parent=27 // pred_fallthru
        _
      // Predicated region
      $region37: #{cfg_masked_denoiser_forward.1} parent=27 // pred_check
        %p304 = pneg %p89
      $region38: #{cfg_masked_denoiser_forward.1} parent=27 // pred_check_branch
        %306 = sbr.rel (%p304) target = $region40
      $region39: #{cfg_masked_denoiser_forward.1} parent=27 // pred_region
        %p307 = scmp.lt.s32.totalorder %s17, 1
        %s308 = scalar_select %p307, %s17, 1
        %s309 = smul.addr %s308, 8
        %s310 = scalar_lea.vmem %s3, %s309
      $region40: #{cfg_masked_denoiser_forward.1} parent=27 // pred_fallthru
        _
      // Predicated region
      $region41: #{cfg_masked_denoiser_forward.1} parent=27 // pred_check
        %p311 = pneg %p115
      $region42: #{cfg_masked_denoiser_forward.1} parent=27 // pred_check_branch
        %313 = sbr.rel (%p311) target = $region44
      $region43: #{cfg_masked_denoiser_forward.1} parent=27 // pred_region
        %p314 = scmp.lt.s32.totalorder %s17, 1
        %s315 = scalar_select %p314, %s17, 1
        %s316 = smul.addr %s315, 8
        %s317 = scalar_lea.vmem %s4, %s316
      $region44: #{cfg_masked_denoiser_forward.1} parent=27 // pred_fallthru
        _
      // Predicated region
      $region45: #{cfg_masked_denoiser_forward.1} parent=27 // pred_check
        %p318 = pneg %p204
      $region46: #{cfg_masked_denoiser_forward.1} parent=27 // pred_check_branch
        %320 = sbr.rel (%p318) target = $region48
      $region47: #{cfg_masked_denoiser_forward.1} parent=27 // pred_region
        %p321 = scmp.lt.s32.totalorder %s17, 1
        %s322 = scalar_select %p321, %s17, 1
        %s323 = smul.addr %s322, 2
        %s324 = scalar_lea.vmem %s8, %s323
      $region48: #{cfg_masked_denoiser_forward.1} parent=27 // pred_fallthru
        _
      // Predicated region
      $region49: #{cfg_masked_denoiser_forward.1} parent=27 // pred_check
        %p325 = pneg %p230
      $region50: #{cfg_masked_denoiser_forward.1} parent=27 // pred_check_branch
        %327 = sbr.rel (%p325) target = $region52
      $region51: #{cfg_masked_denoiser_forward.1} parent=27 // pred_region
        %p328 = scmp.lt.s32.totalorder %s17, 1
        %s329 = scalar_select %p328, %s17, 1
        %s330 = smul.addr %s329, 2
        %s331 = smul.addr %s330, 4
        %s332 = scalar_lea.vmem %s9, %s331
      $region52: #{cfg_masked_denoiser_forward.1} parent=27 // pred_fallthru
        _
    $region28: #{cfg_masked_denoiser_forward.1} parent=5 // pred_fallthru
      _
    %p333 = scmp.le.s32.totalorder 1, %s17
    %p334 = scmp.lt.s32.totalorder %s17, 3
    %p335 = pnand %p333, %p334
    %p336 = pneg %p335
    // Predicated region
    $region53: #{cfg_masked_denoiser_forward.1} parent=5 // pred_check
      _
    $region54: #{cfg_masked_denoiser_forward.1} parent=5 // pred_check_branch
      %338 = sbr.rel (%p335) target = $region56
    $region55: #{cfg_masked_denoiser_forward.1} parent=5 // pred_region
      %s339 = ssub.s32 %s17, 1
      %p340 = scmp.lt.s32.totalorder %s22, 1
      %s341 = scalar_select %p340, %s22, 1
      %s342 = smul.addr %s341, 2
      %s343 = smul.addr %s342, 4
      %s344 = scalar_lea.vmem %s1, %s343
      %p345 = pneg %p43
      %p346 = pneg %p40
      %p347 = scmp.lt.s32.totalorder %s22, 1
      %s348 = scalar_select %p347, %s22, 1
      %s349 = scalar_lea.vmem %s2, %s348
      %p350 = pneg %p69
      %p351 = pneg %p66
      %p352 = scmp.lt.s32.totalorder %s22, 1
      %s353 = scalar_select %p352, %s22, 1
      %s354 = smul.addr %s353, 8
      %s355 = scalar_lea.vmem %s3, %s354
      %p356 = pneg %p95
      %p357 = pneg %p92
      %p358 = scmp.lt.s32.totalorder %s22, 1
      %s359 = scalar_select %p358, %s22, 1
      %s360 = smul.addr %s359, 8
      %s361 = scalar_lea.vmem %s4, %s360
      %p362 = pneg %p121
      %p363 = pneg %p118
      %p364 = pneg %p142
      %p365 = pneg %p139
      %p366 = pneg %p163
      %p367 = pneg %p160
      %p368 = pneg %p184
      %p369 = pneg %p181
      %p370 = scmp.lt.s32.totalorder %s22, 1
      %s371 = scalar_select %p370, %s22, 1
      %s372 = smul.addr %s371, 2
      %s373 = scalar_lea.vmem %s8, %s372
      %p374 = pneg %p210
      %p375 = pneg %p207
      %p376 = scmp.lt.s32.totalorder %s22, 1
      %s377 = scalar_select %p376, %s22, 1
      %s378 = smul.addr %s377, 2
      %s379 = smul.addr %s378, 4
      %s380 = scalar_lea.vmem %s9, %s379
      %p381 = pneg %p236
      %p382 = pneg %p233
      %p383 = pneg %p262
      %p384 = pneg %p259
      %p385 = scmp.lt.s32.totalorder %s22, 1
      %s386 = scalar_select %p385, %s22, 1
      %s387 = smul.addr %s386, 2
      %s388 = smul.addr %s387, 4
      %s389 = scalar_lea.vmem %s10, %s388
      %p390 = scmp.lt.s32.totalorder %s22, 1
      %s391 = scalar_select %p390, %s22, 1
      %s392 = smul.addr %s391, 2
      %s393 = smul.addr %s392, 4
      %s394 = scalar_lea.vmem %s1, %s393
      %p395 = scmp.lt.s32.totalorder %s22, 1
      %s396 = scalar_select %p395, %s22, 1
      %s397 = scalar_lea.vmem %s2, %s396
      %p398 = scmp.lt.s32.totalorder %s22, 1
      %s399 = scalar_select %p398, %s22, 1
      %s400 = smul.addr %s399, 8
      %s401 = scalar_lea.vmem %s3, %s400
      %p402 = scmp.lt.s32.totalorder %s22, 1
      %s403 = scalar_select %p402, %s22, 1
      %s404 = smul.addr %s403, 8
      %s405 = scalar_lea.vmem %s4, %s404
      %p406 = scmp.lt.s32.totalorder %s22, 1
      %s407 = scalar_select %p406, %s22, 1
      %s408 = smul.addr %s407, 2
      %s409 = scalar_lea.vmem %s8, %s408
      %p410 = scmp.lt.s32.totalorder %s22, 1
      %s411 = scalar_select %p410, %s22, 1
      %s412 = smul.addr %s411, 2
      %s413 = smul.addr %s412, 4
      %s414 = scalar_lea.vmem %s9, %s413
      %p415 = scmp.lt.s32.totalorder %s22, 1
      %s416 = scalar_select %p415, %s22, 1
      %s417 = smul.addr %s416, 2
      %s418 = smul.addr %s417, 4
      %s419 = scalar_lea.vmem %s10, %s418
      %s420 = sld [smem:[#allocation3]]
      %v421 = vld [vmem:[%s394] sm:$0xff]
      %v422 = vld [vmem:[%s397] sm:$0x1]
      %v423 = vld [vmem:[%s5] sm:$0xf]
      %v425 = vlaneseq
      %v426 = vshrl.u32 %v425, 7
      %v427 = vsub.s32 0, %v426
      %v428 = vrot.slane %v422, %v427
      %429 = vset.pattern.permute.xlu0 0
      %430 = vperm.xlu0 %429, %v428
      %v431 = vpop.permute.xlu0 %430
      %v433 = vmul.f32 %v423, %v431
      %435 = vset.pattern.permute.xlu0 0
      %436 = vperm.xlu0 %435, %v433
      %v437 = vpop.permute.xlu0 %436
      %v440 = vlaneseq
      %v441 = vshrl.u32 %v440, 7
      %v442 = vsub.s32 0, %v441
      %v443 = vrot.slane %v421, %v442
      %v444 = vlaneseq
      %v445 = vshrl.u32 %v444, 7
      %v446 = vsub.s32 4, %v445
      %v447 = vrot.slane %v421, %v446
      %v450 = vlaneseq
      %v451 = vshrl.u32 %v450, 7
      %v452 = vsub.s32 0, %v451
      %v453 = vrot.slane %v443, %v452
      %v454 = vlaneseq
      %v455 = vshrl.u32 %v454, 7
      %v456 = vsub.s32 0, %v455
      %v457 = vrot.slane %v447, %v456
      %v458 = vmul.f32 %v437, %v453
      %v459 = vmul.f32 %v437, %v457
      %460 = vset.pattern.permute.xlu0 1
      %461 = vperm.xlu0 %460, %v433
      %v462 = vpop.permute.xlu0 %461
      %v464 = vlaneseq
      %v465 = vshrl.u32 %v464, 7
      %v466 = vsub.s32 1, %v465
      %v467 = vrot.slane %v421, %v466
      %v468 = vlaneseq
      %v469 = vshrl.u32 %v468, 7
      %v470 = vsub.s32 5, %v469
      %v471 = vrot.slane %v421, %v470
      %v474 = vlaneseq
      %v475 = vshrl.u32 %v474, 7
      %v476 = vsub.s32 1, %v475
      %v477 = vrot.slane %v467, %v476
      %v478 = vlaneseq
      %v479 = vshrl.u32 %v478, 7
      %v480 = vsub.s32 1, %v479
      %v481 = vrot.slane %v471, %v480
      %v482 = vmul.f32 %v462, %v477
      %v483 = vmul.f32 %v462, %v481
      %v484 = vadd.f32 %v458, %v482
      %v485 = vadd.f32 %v459, %v483
      %486 = vset.pattern.permute.xlu0 2
      %487 = vperm.xlu0 %486, %v433
      %v488 = vpop.permute.xlu0 %487
      %v490 = vlaneseq
      %v491 = vshrl.u32 %v490, 7
      %v492 = vsub.s32 2, %v491
      %v493 = vrot.slane %v421, %v492
      %v494 = vlaneseq
      %v495 = vshrl.u32 %v494, 7
      %v496 = vsub.s32 6, %v495
      %v497 = vrot.slane %v421, %v496
      %v500 = vlaneseq
      %v501 = vshrl.u32 %v500, 7
      %v502 = vsub.s32 2, %v501
      %v503 = vrot.slane %v493, %v502
      %v504 = vlaneseq
      %v505 = vshrl.u32 %v504, 7
      %v506 = vsub.s32 2, %v505
      %v507 = vrot.slane %v497, %v506
      %v508 = vmul.f32 %v488, %v503
      %v509 = vmul.f32 %v488, %v507
      %v510 = vadd.f32 %v484, %v508
      %v511 = vadd.f32 %v485, %v509
      %512 = vset.pattern.permute.xlu0 3
      %513 = vperm.xlu0 %512, %v433
      %v514 = vpop.permute.xlu0 %513
      %v516 = vlaneseq
      %v517 = vshrl.u32 %v516, 7
      %v518 = vsub.s32 3, %v517
      %v519 = vrot.slane %v421, %v518
      %v520 = vlaneseq
      %v521 = vshrl.u32 %v520, 7
      %v522 = vsub.s32 7, %v521
      %v523 = vrot.slane %v421, %v522
      %v526 = vlaneseq
      %v527 = vshrl.u32 %v526, 7
      %v528 = vsub.s32 3, %v527
      %v529 = vrot.slane %v519, %v528
      %v530 = vlaneseq
      %v531 = vshrl.u32 %v530, 7
      %v532 = vsub.s32 3, %v531
      %v533 = vrot.slane %v523, %v532
      %v534 = vmul.f32 %v514, %v529
      %v535 = vmul.f32 %v514, %v533
      %v536 = vadd.f32 %v510, %v534
      %v537 = vadd.f32 %v511, %v535
      %v538 = vld [vmem:[%s401] sm:$0xff]
      %vm539 = vcmask 261120
      %v540 = vsel %vm539, %v538, 0.0
      %v541 = vrot.slane %v540, 4
      %v542 = vadd.f32 %v540, %v541
      %v543 = vrot.slane %v542, 2
      %v544 = vadd.f32 %v542, %v543
      %v545 = vrot.slane %v544, 1
      %v546 = vadd.f32 %v544, %v545
      %v547 = vrcp.pop 8.0
      %v548 = vmul.f32 %v546, %v547
      %v549 = vld [vmem:[%s405] sm:$0xff]
      %v550 = vsel %vm539, %v549, 0.0
      %v551 = vrot.slane %v550, 4
      %v552 = vadd.f32 %v550, %v551
      %v553 = vrot.slane %v552, 2
      %v554 = vadd.f32 %v552, %v553
      %v555 = vrot.slane %v554, 1
      %v556 = vadd.f32 %v554, %v555
      %v557 = vmul.f32 %v556, %v547
      %v558 = vsub.f32 %v557, %v548
      %v559 = vstv %s420
      %v560 = vmul.f32 %v558, %v559
      %v561 = vadd.f32 %v548, %v560
      %v562 = vld [vmem:[%s6] sm:$0xf]
      %v563 = vmul.f32 %v562, %v561
      %vm564 = vcmask 257024
      %v565 = vsel %vm564, %v563, 0.0
      %566 = vadd.xlane.f32.xlu0 %v565
      %v567 = vpop.xlane.xlu0 %566
      %v568 = vadd.f32 %v536, %v567
      %v569 = vadd.f32 %v537, %v567
      %v570 = vld [vmem:[%s7] sm:$0xf]
      %572 = vset.pattern.permute.xlu0 0
      %573 = vperm.xlu0 %572, %v570
      %v574 = vpop.permute.xlu0 %573
      %v576 = vadd.f32 %v568, %v574
      %v577 = vadd.f32 %v569, %v574
      %v578 = vld [vmem:[%s409] sm:$0x3]
      %v579 = vld [vmem:[%s414] sm:$0xff]
      %v581 = vcombine.high %v579, %v579
      %v583 = vsub.f32 %v576, %v579
      %v584 = vsub.f32 %v577, %v581
      %v586 = vlaneseq
      %v587 = vshrl.u32 %v586, 7
      %v588 = vsub.s32 0, %v587
      %v589 = vrot.slane %v578, %v588
      %v590 = vlaneseq
      %v591 = vshrl.u32 %v590, 7
      %v592 = vsub.s32 1, %v591
      %v593 = vrot.slane %v578, %v592
      %v596 = vmul.f32 %v589, %v583
      %v597 = vmul.f32 %v593, %v584
      %v600 = vcombine.low %v596, %v597
      %v602 = vadd.f32 %v579, %v600
      %603 = vst [vmem:[%s419] sm:$0xff] %v602
      %p604 = scmp.lt.s32.totalorder %s22, 1
      %s605 = scalar_select %p604, %s22, 1
      %s606 = smul.addr %s605, 2
      %s607 = smul.addr %s606, 4
      %s608 = scalar_lea.vmem %s10, %s607
      // Predicated region
      $region57: #{cfg_masked_denoiser_forward.1} parent=55 // pred_check
        %p609 = pneg %p259
      $region58: #{cfg_masked_denoiser_forward.1} parent=55 // pred_check_branch
        %611 = sbr.rel (%p609) target = $region60
      $region59: #{cfg_masked_denoiser_forward.1} parent=55 // pred_region
        _
      $region60: #{cfg_masked_denoiser_forward.1} parent=55 // pred_fallthru
        _
    $region56: #{cfg_masked_denoiser_forward.1} parent=5 // pred_fallthru
      _
    %p612 = scmp.le.s32.totalorder 2, %s17
    // Predicated region
    $region61: #{cfg_masked_denoiser_forward.1} parent=5 // pred_check
      %p613 = pneg %p612
    $region62: #{cfg_masked_denoiser_forward.1} parent=5 // pred_check_branch
      %615 = sbr.rel (%p613) target = $region64
    $region63: #{cfg_masked_denoiser_forward.1} parent=5 // pred_region
      %s616 = ssub.s32 %s17, 2
      // Predicated region
      $region65: #{cfg_masked_denoiser_forward.1} parent=63 // pred_check
        %p617 = pneg %p265
      $region66: #{cfg_masked_denoiser_forward.1} parent=63 // pred_check_branch
        %619 = sbr.rel (%p617) target = $region68
      $region67: #{cfg_masked_denoiser_forward.1} parent=63 // pred_region
        %p620 = scmp.lt.s32.totalorder %s23, 1
        %s621 = scalar_select %p620, %s23, 1
        %s622 = smul.addr %s621, 2
        %s623 = smul.addr %s622, 4
        %s624 = scalar_lea.vmem %s10, %s623
      $region68: #{cfg_masked_denoiser_forward.1} parent=63 // pred_fallthru
        _
    $region64: #{cfg_masked_denoiser_forward.1} parent=5 // pred_fallthru
      _
  $region6: #{cfg_masked_denoiser_forward.1} parent=0 // loop_footer
    %s21 = sadd.s32 1, %s17
  $region7: #{cfg_masked_denoiser_forward.1} parent=0 // loop_footer_branch
    %16 = sbr.rel target = $region3
  $region8: #{cfg_masked_denoiser_forward.1} parent=0 // loop_exit
    _

</llo_original>
